<compile_context>
chip_gen: v7x
topology: tpu7x:2x2x1
jax: 0.10.0
libtpu: 0.0.40
codegen_flags: <defaults>
</compile_context>

<pallas_src>
import functools

import jax
import jax.numpy as jnp
from jax.experimental import pallas as pl
from jax.experimental.pallas import tpu as pltpu

HIDDEN = 64          # selection_layer output width (fixed at 64)
LANE = 128           # TPU lane width
SUBLANE = 8          # f32 sublane tile


def _round_up(x, m):
    return ((x + m - 1) // m) * m


def time_encoder_kernel(t_ref, m_ref, w1_ref, b1_ref, w2_ref, b2_ref, o_ref,
                        *, bf16_eup):
    # t_ref : (Bt, 1, S)      raw seq_time_step (f32)
    # m_ref : (Bt, 1, S)      mask as f32 (1.0 == masked/True)
    # w1_ref: (1, 64)         selection_layer weight, already divided by 180 (f32)
    # b1_ref: (1, 64)         selection_layer bias (f32)
    # w2_ref: (64, E_pad)     weight_layer weight, transposed + zero-padded (bf16)
    # b2_ref: (1, E_pad)      weight_layer bias, zero-padded (f32)
    # o_ref : (Bt, S, E)      softmax over the sequence axis (f32), true E width
    bt, _, s = t_ref.shape
    e_pad = w2_ref.shape[-1]
    e_out = o_ref.shape[-1]

    # Linear(1, 64); the /180 is folded into w1 on the host.
    t = t_ref[:, 0, :]                                      # (Bt, S)
    h = t[:, :, None] * w1_ref[...] + b1_ref[...]           # (Bt, S, 64) f32

    # 1 - tanh(h^2): bf16 EUP where the chip supports it (v6e / v7x).
    if bf16_eup:
        hb = h.astype(jnp.bfloat16)
        f2 = (1.0 - jnp.tanh(hb * hb)).reshape(bt * s, HIDDEN)       # bf16
    else:
        f2 = (1.0 - jnp.tanh(h * h)).reshape(bt * s, HIDDEN).astype(jnp.bfloat16)

    # Linear(64, E_pad) on the MXU: bf16 operands, f32 accumulation.
    logits = jnp.dot(f2, w2_ref[...], preferred_element_type=jnp.float32)
    logits = jnp.maximum(logits + b2_ref[...], 0.0)         # (Bt*S, E_pad) f32
    logits = logits.reshape(bt, s, e_pad)                   # layout-preserving (S % 8 == 0)

    # masked_fill(mask == True, -inf); padded sequence rows carry mask == 1.0.
    masked = jnp.where(m_ref[:, 0, :][:, :, None] > 0.0, -jnp.inf, logits)

    # Softmax over the sequence axis (dim=1); max / sum / multiply kept in f32.
    mx = jnp.max(masked, axis=1, keepdims=True)             # (Bt, 1, E_pad)
    if bf16_eup:
        e = jnp.exp((masked - mx).astype(jnp.bfloat16)).astype(jnp.float32)
    else:
        e = jnp.exp(masked - mx)                            # (Bt, S, E_pad)
    denom = jnp.sum(e, axis=1, keepdims=True)               # (Bt, 1, E_pad)
    out = e * pl.reciprocal(denom, approx=True)
    o_ref[...] = out[:, :, :e_out]                          # only the true E columns hit HBM


def _hw_config():
    """Returns (vmem_budget_bytes, vmem_limit_bytes, multi_tensorcore, bf16_eup)."""
    kind = ""
    try:
        kind = jax.devices()[0].device_kind.lower()
    except Exception:
        pass
    is_v7 = ("v7" in kind) or ("7x" in kind)
    is_v6 = "v6" in kind
    try:
        vmem_phys = int(pltpu.get_tpu_info().vmem_capacity_bytes)
    except Exception:
        vmem_phys = (64 << 20) if is_v7 else (128 << 20)
    vmem_limit = min(vmem_phys * 3 // 4, 100 << 20)   # v7x: 48 MiB, v5e/v6e: 96 MiB
    vmem_budget = min(vmem_phys // 2, 72 << 20)       # v7x: 32 MiB, v5e/v6e: 64 MiB
    multi_tc = is_v7                                  # v7x: 2 TensorCores share the grid
    bf16_eup = is_v6 or is_v7                         # v5e (and older) lack bf16 VPU/EUP
    return vmem_budget, vmem_limit, multi_tc, bf16_eup


def _choose_block_batch(B, s_pad, e_pad, e_out, budget_bytes, multi_tc):
    """Batch elements per grid step, sized against the real per-step VMEM footprint."""
    def vmem_bytes(bt):
        rows = bt * s_pad
        # VMEM buffers are (8,128)-tile padded, so narrow dims round up.
        out_blk = 2 * rows * _round_up(e_out, LANE) * 4              # dbl-buffered output
        in_blk = 2 * 2 * bt * SUBLANE * _round_up(s_pad, LANE) * 4   # dbl-buffered t + mask
        wgt = 2 * (HIDDEN * e_pad * 2 + e_pad * 4 + 2 * HIDDEN * 4)  # dbl-buffered weights
        # Live in-body intermediates: h (f32) + f (bf16) at width 64 (lane-padded),
        # logits / masked / e / out at width e_pad (f32).
        interm = rows * _round_up(HIDDEN, LANE) * (4 + 2) + 4 * rows * e_pad * 4
        return out_blk + in_blk + wgt + interm

    divisors = [d for d in range(1, B + 1) if B % d == 0]
    fitting = [d for d in divisors if vmem_bytes(d) <= budget_bytes]
    if not fitting:
        # Even Bt=1 overflows the budget (huge S*E): return the smallest block rather
        # than a known-oversized one.
        # TODO(synk): split the sequence-axis softmax into a two-pass reduction for that case.
        return 1
    # Prefer blocks that feed the MXU a decent M (K is fixed at 64, N = E_pad).
    big_m = [d for d in fitting if d * s_pad >= 256]
    pool = big_m if big_m else fitting
    if multi_tc:
        even = [d for d in pool if (B // d) % 2 == 0]    # balanced across v7x's 2 TCs
        if even:
            return max(even)
        multi = [d for d in pool if B // d >= 2]
        if multi:
            return max(multi)
    return max(pool)                                     # single TC: biggest block, fewest steps


@jax.jit
def time_encoder(seq_time_step, mask, w1, b1, w2, b2):
    """seq_time_step: (B, S) f32; mask: (B, S, 1) bool; w1: (64, 1); b1: (64,);
    w2: (E, 64); b2: (E,). Returns (B, S, E) f32 softmax weights (softmax over dim 1)."""
    B, S = seq_time_step.shape
    E = w2.shape[0]
    E_pad = _round_up(max(E, LANE), LANE)      # lane-dense width for the MXU matmul
    S_pad = _round_up(S, SUBLANE)              # sublane-aligned -> free in-kernel reshapes

    budget, vmem_limit, multi_tc, bf16_eup = _hw_config()

    t = seq_time_step.astype(jnp.float32).reshape(B, 1, S)
    m = mask.reshape(B, 1, S).astype(jnp.float32)
    if S_pad != S:
        pad = [(0, 0), (0, 0), (0, S_pad - S)]
        t = jnp.pad(t, pad)                        # padded time values are irrelevant
        m = jnp.pad(m, pad, constant_values=1.0)   # padded rows masked -> exp(-inf) = 0

    # Fold the /180 into the Linear(1, 64) weight (mathematically exact).
    w1v = (w1.astype(jnp.float32) / 180.0).reshape(1, HIDDEN)
    b1v = b1.astype(jnp.float32).reshape(1, HIDDEN)

    # Linear(64, E): transpose, zero-pad the feature axis to E_pad, cast w2 to bf16.
    w2t = jnp.zeros((HIDDEN, E_pad), jnp.float32).at[:, :E].set(w2.T.astype(jnp.float32))
    w2t = w2t.astype(jnp.bfloat16)
    b2v = jnp.zeros((1, E_pad), jnp.float32).at[:, :E].set(
        b2.astype(jnp.float32).reshape(1, E))

    Bt = _choose_block_batch(B, S_pad, E_pad, E, budget, multi_tc)
    grid = (B // Bt,)

    kernel = functools.partial(time_encoder_kernel, bf16_eup=bf16_eup)

    grid_spec = pltpu.PrefetchScalarGridSpec(
        num_scalar_prefetch=0,
        grid=grid,
        in_specs=[
            pl.BlockSpec((Bt, 1, S_pad), lambda b: (b, 0, 0)),   # t
            pl.BlockSpec((Bt, 1, S_pad), lambda b: (b, 0, 0)),   # mask
            pl.BlockSpec((1, HIDDEN), lambda b: (0, 0)),         # w1 (scaled by 1/180)
            pl.BlockSpec((1, HIDDEN), lambda b: (0, 0)),         # b1
            pl.BlockSpec((HIDDEN, E_pad), lambda b: (0, 0)),     # w2 (bf16, padded)
            pl.BlockSpec((1, E_pad), lambda b: (0, 0)),          # b2 (padded)
        ],
        out_specs=pl.BlockSpec((Bt, S_pad, E), lambda b: (b, 0, 0)),
    )

    out = pl.pallas_call(
        kernel,
        out_shape=jax.ShapeDtypeStruct((B, S_pad, E), jnp.float32),
        grid_spec=grid_spec,
        compiler_params=pltpu.CompilerParams(
            dimension_semantics=("parallel",),
            vmem_limit_bytes=vmem_limit,
        ),
    )(t, m, w1v, b1v, w2t, b2v)

    return out[:, :S, :] if S_pad != S else out


def _reference(seq_time_step, mask, w1, b1, w2, b2):
    t = seq_time_step.astype(jnp.float32)[..., None] / 180.0          # (B, S, 1)
    h = t @ w1.T + b1                                                  # (B, S, 64)
    f = 1.0 - jnp.tanh(h ** 2)
    y = jnp.maximum(f @ w2.T + b2, 0.0)                                # (B, S, E)
    y = jnp.where(mask, -jnp.inf, y)
    return jax.nn.softmax(y, axis=1)


if __name__ == "__main__":
    B, S, E = 2, 10, 32          # S not a multiple of 8: exercises the padding path
    key = jax.random.PRNGKey(0)
    k_t, k_m, k_w1, k_b1, k_w2, k_b2 = jax.random.split(key, 6)

    # Deterministic synthetic parameters (PyTorch-style uniform init).
    w1 = jax.random.uniform(k_w1, (HIDDEN, 1), jnp.float32, -1.0, 1.0)   # Linear(1, 64)
    b1 = jax.random.uniform(k_b1, (HIDDEN,), jnp.float32, -1.0, 1.0)
    lim = 1.0 / jnp.sqrt(jnp.float32(HIDDEN))
    w2 = jax.random.uniform(k_w2, (E, HIDDEN), jnp.float32, -lim, lim)   # Linear(64, E)
    b2 = jax.random.uniform(k_b2, (E,), jnp.float32, -lim, lim)

    # Inputs: time steps in days, boolean padding mask (keep >= 1 valid row per batch;
    # an all-masked sequence yields NaN in both the kernel and the PyTorch reference).
    seq_time_step = jax.random.uniform(k_t, (B, S), jnp.float32, 0.0, 365.0)
    mask = (jax.random.uniform(k_m, (B, S, 1)) > 0.7)
    mask = mask.at[:, 0, :].set(False)

    out = time_encoder(seq_time_step, mask, w1, b1, w2, b2)
    out = jax.block_until_ready(out)

    ref = _reference(seq_time_step, mask, w1, b1, w2, b2)
    assert out.shape == (B, S, E)
    # Tolerance covers bf16 MXU matmul, bf16 tanh/exp (v6e/v7x) and the approx reciprocal.
    assert jnp.allclose(out, ref, atol=3e-2, rtol=3e-2), "mismatch vs reference"

    print("KERNEL_OK")
</pallas_src>

<mosaic_0001>
module attributes {stable_mosaic.version = 11 : i64} {
  func.func @time_encoder_kernel(%arg0: i32, %arg1: memref<2x1x16xf32, #tpu.memory_space<vmem>>, %arg2: memref<2x1x16xf32, #tpu.memory_space<vmem>>, %arg3: memref<1x64xf32, #tpu.memory_space<vmem>>, %arg4: memref<1x64xf32, #tpu.memory_space<vmem>>, %arg5: memref<64x128xbf16, #tpu.memory_space<vmem>>, %arg6: memref<1x128xf32, #tpu.memory_space<vmem>>, %arg7: memref<2x16x32xf32, #tpu.memory_space<vmem>>) attributes {dimension_semantics = [#tpu.dimension_semantics<parallel>], iteration_bounds = array<i64: 1>, scalar_prefetch = 0 : i64, scratch_operands = 0 : i64, tpu.core_type = #tpu.core_type<tc>, window_params = [{transform_indices = @transform_0, window_bounds = array<i64: 2, 1, 16>}, {transform_indices = @transform_1, window_bounds = array<i64: 2, 1, 16>}, {pipeline_mode = #tpu.pipeline_mode<synchronous>, transform_indices = @transform_2, window_bounds = array<i64: 1, 64>}, {pipeline_mode = #tpu.pipeline_mode<synchronous>, transform_indices = @transform_3, window_bounds = array<i64: 1, 64>}, {pipeline_mode = #tpu.pipeline_mode<synchronous>, transform_indices = @transform_4, window_bounds = array<i64: 64, 128>}, {pipeline_mode = #tpu.pipeline_mode<synchronous>, transform_indices = @transform_5, window_bounds = array<i64: 1, 128>}, {transform_indices = @transform_6, window_bounds = array<i64: 2, 16, 32>}]} {
    %c0 = arith.constant 0 : index
    %c0_0 = arith.constant 0 : index
    %c0_1 = arith.constant 0 : index
    %0 = vector.load %arg1[%c0, %c0_0, %c0_1] : memref<2x1x16xf32, #tpu.memory_space<vmem>>, vector<2x1x16xf32>
    %1 = vector.shape_cast %0 : vector<2x1x16xf32> to vector<2x16xf32>
    %2 = vector.shape_cast %1 : vector<2x16xf32> to vector<2x16x1xf32>
    %c0_2 = arith.constant 0 : index
    %c0_3 = arith.constant 0 : index
    %3 = vector.load %arg3[%c0_2, %c0_3] : memref<1x64xf32, #tpu.memory_space<vmem>>, vector<1x64xf32>
    %4 = vector.shape_cast %3 : vector<1x64xf32> to vector<1x1x64xf32>
    %5 = vector.broadcast %2 : vector<2x16x1xf32> to vector<2x16x64xf32>
    %6 = vector.broadcast %4 : vector<1x1x64xf32> to vector<2x16x64xf32>
    %7 = arith.mulf %5, %6 : vector<2x16x64xf32>
    %c0_4 = arith.constant 0 : index
    %c0_5 = arith.constant 0 : index
    %8 = vector.load %arg4[%c0_4, %c0_5] : memref<1x64xf32, #tpu.memory_space<vmem>>, vector<1x64xf32>
    %9 = vector.shape_cast %8 : vector<1x64xf32> to vector<1x1x64xf32>
    %10 = vector.broadcast %9 : vector<1x1x64xf32> to vector<2x16x64xf32>
    %11 = arith.addf %7, %10 : vector<2x16x64xf32>
    %12 = arith.mulf %11, %11 : vector<2x16x64xf32>
    %13 = math.tanh %12 : vector<2x16x64xf32>
    %cst = arith.constant 1.000000e+00 : f32
    %14 = vector.broadcast %cst : f32 to vector<2x16x64xf32>
    %15 = arith.subf %14, %13 : vector<2x16x64xf32>
    %16 = vector.shape_cast %15 : vector<2x16x64xf32> to vector<32x64xf32>
    %17 = arith.truncf %16 : vector<32x64xf32> to vector<32x64xbf16>
    %c0_6 = arith.constant 0 : index
    %c0_7 = arith.constant 0 : index
    %18 = vector.load %arg5[%c0_6, %c0_7] : memref<64x128xbf16, #tpu.memory_space<vmem>>, vector<64x128xbf16>
    %cst_8 = arith.constant dense<0.000000e+00> : vector<32x128xf32>
    %19 = tpu.matmul %17, %18, %cst_8 {dimension_numbers = #tpu.dot_dimension_numbers<[1], [0], [0], [1], [0, 0, 1, 1], [], []>} : vector<32x64xbf16>, vector<64x128xbf16>, vector<32x128xf32> -> vector<32x128xf32>
    %c0_9 = arith.constant 0 : index
    %c0_10 = arith.constant 0 : index
    %20 = vector.load %arg6[%c0_9, %c0_10] : memref<1x128xf32, #tpu.memory_space<vmem>>, vector<1x128xf32>
    %21 = vector.broadcast %20 : vector<1x128xf32> to vector<32x128xf32>
    %22 = arith.addf %19, %21 : vector<32x128xf32>
    %cst_11 = arith.constant 0.000000e+00 : f32
    %23 = vector.broadcast %cst_11 : f32 to vector<32x128xf32>
    %24 = arith.maximumf %22, %23 : vector<32x128xf32>
    %25 = vector.shape_cast %24 : vector<32x128xf32> to vector<2x16x128xf32>
    %c0_12 = arith.constant 0 : index
    %c0_13 = arith.constant 0 : index
    %c0_14 = arith.constant 0 : index
    %26 = vector.load %arg2[%c0_12, %c0_13, %c0_14] : memref<2x1x16xf32, #tpu.memory_space<vmem>>, vector<2x1x16xf32>
    %27 = vector.shape_cast %26 : vector<2x1x16xf32> to vector<2x16xf32>
    %28 = vector.shape_cast %27 : vector<2x16xf32> to vector<2x16x1xf32>
    %cst_15 = arith.constant 0.000000e+00 : f32
    %29 = vector.broadcast %cst_15 : f32 to vector<2x16x1xf32>
    %30 = arith.cmpf ogt, %28, %29 : vector<2x16x1xf32>
    %cst_16 = arith.constant 0xFF800000 : f32
    %31 = vector.shape_cast %30 : vector<2x16x1xi1> to vector<2x16x1xi1>
    %32 = vector.broadcast %31 : vector<2x16x1xi1> to vector<2x16x128xi1>
    %33 = vector.broadcast %cst_16 : f32 to vector<2x16x128xf32>
    %34 = arith.select %32, %33, %25 : vector<2x16x128xi1>, vector<2x16x128xf32>
    %cst_17 = arith.constant dense<0xFF800000> : vector<2x128xf32>
    %35 = vector.multi_reduction <maximumf>, %34, %cst_17 [1] : vector<2x16x128xf32> to vector<2x128xf32>
    %36 = vector.shape_cast %35 : vector<2x128xf32> to vector<2x1x128xf32>
    %37 = vector.broadcast %36 : vector<2x1x128xf32> to vector<2x16x128xf32>
    %38 = arith.subf %34, %37 : vector<2x16x128xf32>
    %39 = math.exp %38 : vector<2x16x128xf32>
    %cst_18 = arith.constant dense<0.000000e+00> : vector<2x128xf32>
    %40 = vector.multi_reduction <add>, %39, %cst_18 [1] : vector<2x16x128xf32> to vector<2x128xf32>
    %41 = vector.shape_cast %40 : vector<2x128xf32> to vector<2x1x128xf32>
    %42 = tpu.reciprocal %41 {approx = true} : vector<2x1x128xf32> -> vector<2x1x128xf32>
    %43 = vector.broadcast %42 : vector<2x1x128xf32> to vector<2x16x128xf32>
    %44 = arith.mulf %39, %43 : vector<2x16x128xf32>
    %45 = vector.extract_strided_slice %44 {offsets = [0, 0, 0], sizes = [2, 16, 32], strides = [1, 1, 1]} : vector<2x16x128xf32> to vector<2x16x32xf32>
    %c0_19 = arith.constant 0 : index
    %c0_20 = arith.constant 0 : index
    %c0_21 = arith.constant 0 : index
    %46 = vector.load %arg7[%c0_19, %c0_20, %c0_21] : memref<2x16x32xf32, #tpu.memory_space<vmem>>, vector<2x16x32xf32>
    tpu.vector_store %arg7[%c0_19, %c0_20, %c0_21], %45 {strides = array<i32>} : memref<2x16x32xf32, #tpu.memory_space<vmem>>, vector<2x16x32xf32>,
    return
  }
  func.func @transform_0(%arg0: i32) -> (i32, i32, i32) {
    %c0_i32 = arith.constant 0 : i32
    %c0_i32_0 = arith.constant 0 : i32
    %c0_i32_1 = arith.constant 0 : i32
    return %arg0, %c0_i32, %c0_i32_0 : i32, i32, i32
  }
  func.func @transform_1(%arg0: i32) -> (i32, i32, i32) {
    %c0_i32 = arith.constant 0 : i32
    %c0_i32_0 = arith.constant 0 : i32
    %c0_i32_1 = arith.constant 0 : i32
    return %arg0, %c0_i32, %c0_i32_0 : i32, i32, i32
  }
  func.func @transform_2(%arg0: i32) -> (i32, i32) {
    %c0_i32 = arith.constant 0 : i32
    %c0_i32_0 = arith.constant 0 : i32
    %c0_i32_1 = arith.constant 0 : i32
    return %c0_i32, %c0_i32_0 : i32, i32
  }
  func.func @transform_3(%arg0: i32) -> (i32, i32) {
    %c0_i32 = arith.constant 0 : i32
    %c0_i32_0 = arith.constant 0 : i32
    %c0_i32_1 = arith.constant 0 : i32
    return %c0_i32, %c0_i32_0 : i32, i32
  }
  func.func @transform_4(%arg0: i32) -> (i32, i32) {
    %c0_i32 = arith.constant 0 : i32
    %c0_i32_0 = arith.constant 0 : i32
    %c0_i32_1 = arith.constant 0 : i32
    return %c0_i32, %c0_i32_0 : i32, i32
  }
  func.func @transform_5(%arg0: i32) -> (i32, i32) {
    %c0_i32 = arith.constant 0 : i32
    %c0_i32_0 = arith.constant 0 : i32
    %c0_i32_1 = arith.constant 0 : i32
    return %c0_i32, %c0_i32_0 : i32, i32
  }
  func.func @transform_6(%arg0: i32) -> (i32, i32, i32) {
    %c0_i32 = arith.constant 0 : i32
    %c0_i32_0 = arith.constant 0 : i32
    %c0_i32_1 = arith.constant 0 : i32
    return %arg0, %c0_i32, %c0_i32_0 : i32, i32, i32
  }
}

</mosaic_0001>

<llo_original>
// kernel: time_encoder.1
$region0: #{time_encoder.1}
  #allocation0 [shape = 'u32[]', space=smem, size = 0x4, offset = 0x4, fixed_abs, tag = 'smem constant byte address 0x4 - core index']
  #allocation1 [shape = 'u32[144,128]{1,0:T(1,128)}', space=vmem, size = 0x12000, scoped, tag = 'internal scratch']
  %s0 = inlined_call_operand.hbm [shape: f32[2,1,16], index: 0, kind: input, shape index: {}]
  %s1 = inlined_call_operand.hbm [shape: f32[2,1,16], index: 1, kind: input, shape index: {}]
  %s2 = inlined_call_operand.hbm [shape: f32[1,64], index: 2, kind: input, shape index: {}]
  %s3 = inlined_call_operand.hbm [shape: f32[1,64], index: 3, kind: input, shape index: {}]
  %s4 = inlined_call_operand.hbm [shape: bf16[64,128], index: 4, kind: input, shape index: {}]
  %s5 = inlined_call_operand.hbm [shape: f32[1,128], index: 5, kind: input, shape index: {}]
  %s6 = inlined_call_operand.hbm [shape: f32[2,16,32], index: 6, kind: output, shape index: {}]
  %s7 = sld [smem:[#allocation0]]
  $region58: #{time_encoder.1} parent=0
    _
  %s9 = ssub.s32 1, %s7
  %s10 = scalar_select 0, %s9, %s7
  $region1: #{time_encoder.1} parent=0
    #allocation2 [shape = 'u8[1024]{0}', space=vmem, size = 0x400, scoped, tag = 'input window, operand 0, single buffered']
    #allocation3 [shape = 's32[1]{0}', space=sflag, size = 0x4, scoped, tag = 'scoped memory for time_encoder.1']
    #allocation4 [shape = 's32[1]{0}', space=sflag, size = 0x4, scoped, tag = 'scoped memory for time_encoder.1']
    #allocation5 [shape = 'u8[1024]{0}', space=vmem, size = 0x400, scoped, tag = 'input window, operand 1, single buffered']
    #allocation6 [shape = 's32[1]{0}', space=sflag, size = 0x4, scoped, tag = 'scoped memory for time_encoder.1']
    #allocation7 [shape = 'u8[512]{0}', space=vmem, size = 0x400, scoped, tag = 'input window, operand 2, single buffered']
    #allocation8 [shape = 'u8[512]{0}', space=vmem, size = 0x400, scoped, tag = 'input window, operand 3, single buffered']
    #allocation9 [shape = 's32[1]{0}', space=sflag, size = 0x4, scoped, tag = 'scoped memory for time_encoder.1']
    #allocation10 [shape = 'u8[16384]{0}', space=vmem, size = 0x4000, scoped, tag = 'input window, operand 4, single buffered']
    #allocation11 [shape = 'u8[512]{0}', space=vmem, size = 0x400, scoped, tag = 'input window, operand 5, single buffered']
    #allocation12 [shape = 's32[1]{0}', space=sflag, size = 0x4, scoped, tag = 'scoped memory for time_encoder.1']
    #allocation13 [shape = 'u8[16384]{0}', space=vmem, size = 0x4000, scoped, tag = 'output window, operand 0, single buffered']
    %11 = vsyncpa [#allocation3], 0
    %12 = vsyncpa [#allocation6], 0
    %13 = vsyncpa [#allocation9], 0
    %14 = vsyncpa [#allocation12], 0
    %15 = vsyncpa [#allocation4], 0
    // Predicated region
    $region2: #{time_encoder.1} parent=1 // pred_check
      _
    $region3: #{time_encoder.1} parent=1 // pred_check_branch
      %17 = sbr.rel (0) target = $region5
    $region4: #{time_encoder.1} parent=1 // pred_region
      %s19 = ssub.s32 32, 32
      %20 = vsyncadd [#allocation3], %s19
      %s21 = sshll.u32 [#allocation2], 4
      %s22 = int_to_ptr.vmem [resolvable:$true] %s21
      %27 = dma.hbm_to_vmem [thread:$0]  %s0, 32, %s22, [#allocation3], 16, 16, 1
    $region5: #{time_encoder.1} parent=1 // pred_fallthru
      _
    // Predicated region
    $region6: #{time_encoder.1} parent=1 // pred_check
      _
    $region7: #{time_encoder.1} parent=1 // pred_check_branch
      %29 = sbr.rel (0) target = $region9
    $region8: #{time_encoder.1} parent=1 // pred_region
      %s31 = ssub.s32 32, 32
      %32 = vsyncadd [#allocation6], %s31
      %s33 = sshll.u32 [#allocation5], 4
      %s34 = int_to_ptr.vmem [resolvable:$true] %s33
      %39 = dma.hbm_to_vmem [thread:$0]  %s1, 32, %s34, [#allocation6], 16, 16, 1
    $region9: #{time_encoder.1} parent=1 // pred_fallthru
      _
    // Predicated region
    $region10: #{time_encoder.1} parent=1 // pred_check
      _
    $region11: #{time_encoder.1} parent=1 // pred_check_branch
      %41 = sbr.rel (0) target = $region13
    $region12: #{time_encoder.1} parent=1 // pred_region
      %s43 = ssub.s32 16, 16
      %44 = vsyncadd [#allocation6], %s43
      %s46 = sshll.u32 [#allocation7], 4
      %s47 = int_to_ptr.vmem [resolvable:$true] %s46
      %49 = dma.hbm_to_vmem [thread:$0]  %s2, 16, %s47, [#allocation6]
    $region13: #{time_encoder.1} parent=1 // pred_fallthru
      _
    // Predicated region
    $region14: #{time_encoder.1} parent=1 // pred_check
      _
    $region15: #{time_encoder.1} parent=1 // pred_check_branch
      %51 = sbr.rel (0) target = $region17
    $region16: #{time_encoder.1} parent=1 // pred_region
      %s53 = ssub.s32 16, 16
      %54 = vsyncadd [#allocation9], %s53
      %s56 = sshll.u32 [#allocation8], 4
      %s57 = int_to_ptr.vmem [resolvable:$true] %s56
      %59 = dma.hbm_to_vmem [thread:$0]  %s3, 16, %s57, [#allocation9]
    $region17: #{time_encoder.1} parent=1 // pred_fallthru
      _
    // Predicated region
    $region18: #{time_encoder.1} parent=1 // pred_check
      _
    $region19: #{time_encoder.1} parent=1 // pred_check_branch
      %61 = sbr.rel (0) target = $region21
    $region20: #{time_encoder.1} parent=1 // pred_region
      %s63 = ssub.s32 512, 512
      %64 = vsyncadd [#allocation9], %s63
      %s65 = sshll.u32 [#allocation10], 4
      %s66 = int_to_ptr.vmem [resolvable:$true] %s65
      %71 = dma.hbm_to_vmem [thread:$0]  %s4, 512, %s66, [#allocation9], 64, 64, 4
    $region21: #{time_encoder.1} parent=1 // pred_fallthru
      _
    // Predicated region
    $region22: #{time_encoder.1} parent=1 // pred_check
      _
    $region23: #{time_encoder.1} parent=1 // pred_check_branch
      %73 = sbr.rel (0) target = $region25
    $region24: #{time_encoder.1} parent=1 // pred_region
      %s75 = ssub.s32 16, 16
      %76 = vsyncadd [#allocation12], %s75
      %s78 = sshll.u32 [#allocation11], 4
      %s79 = int_to_ptr.vmem [resolvable:$true] %s78
      %81 = dma.hbm_to_vmem [thread:$0]  %s5, 16, %s79, [#allocation12]
    $region25: #{time_encoder.1} parent=1 // pred_fallthru
      _
    // Predicated region
    $region26: #{time_encoder.1} parent=1 // pred_check
      _
    $region27: #{time_encoder.1} parent=1 // pred_check_branch
      %83 = sbr.rel (0) target = $region29
    $region28: #{time_encoder.1} parent=1 // pred_region
      %84 = dma.done [#allocation3], 32
    $region29: #{time_encoder.1} parent=1 // pred_fallthru
      _
    // Predicated region
    $region30: #{time_encoder.1} parent=1 // pred_check
      _
    $region31: #{time_encoder.1} parent=1 // pred_check_branch
      %86 = sbr.rel (0) target = $region33
    $region32: #{time_encoder.1} parent=1 // pred_region
      %87 = dma.done [#allocation6], 32
    $region33: #{time_encoder.1} parent=1 // pred_fallthru
      _
    // Predicated region
    $region34: #{time_encoder.1} parent=1 // pred_check
      _
    $region35: #{time_encoder.1} parent=1 // pred_check_branch
      %89 = sbr.rel (0) target = $region37
    $region36: #{time_encoder.1} parent=1 // pred_region
      %90 = dma.done [#allocation6], 16
    $region37: #{time_encoder.1} parent=1 // pred_fallthru
      _
    // Predicated region
    $region38: #{time_encoder.1} parent=1 // pred_check
      _
    $region39: #{time_encoder.1} parent=1 // pred_check_branch
      %92 = sbr.rel (0) target = $region41
    $region40: #{time_encoder.1} parent=1 // pred_region
      %93 = dma.done [#allocation9], 16
    $region41: #{time_encoder.1} parent=1 // pred_fallthru
      _
    // Predicated region
    $region42: #{time_encoder.1} parent=1 // pred_check
      _
    $region43: #{time_encoder.1} parent=1 // pred_check_branch
      %95 = sbr.rel (0) target = $region45
    $region44: #{time_encoder.1} parent=1 // pred_region
      %96 = dma.done [#allocation9], 512
    $region45: #{time_encoder.1} parent=1 // pred_fallthru
      _
    // Predicated region
    $region46: #{time_encoder.1} parent=1 // pred_check
      _
    $region47: #{time_encoder.1} parent=1 // pred_check_branch
      %98 = sbr.rel (0) target = $region49
    $region48: #{time_encoder.1} parent=1 // pred_region
      %99 = dma.done [#allocation12], 16
    $region49: #{time_encoder.1} parent=1 // pred_fallthru
      _
    %v101 = vld [vmem:[#allocation2] sm:$0x1]
    %v102 = vld [vmem:[#allocation2 + $0x1] sm:$0x1]
    %v103 = vlaneseq
    %v104 = vshrl.u32 %v103, 7
    %v105 = vsub.s32 0, %v104
    %v106 = vrot.slane %v101, %v105
    %108 = vbcast.lane.b32.xlu0 %v106, 256
    %v109 = vpop.permute.xlu0 %108
    %s111 = sor.u32 256, 8
    %112 = vbcast.lane.b32.xlu0 %v106, %s111
    %v113 = vpop.permute.xlu0 %112
    %v114 = vlaneseq
    %v115 = vshrl.u32 %v114, 7
    %v116 = vsub.s32 0, %v115
    %v117 = vrot.slane %v102, %v116
    %119 = vbcast.lane.b32.xlu0 %v117, 256
    %v120 = vpop.permute.xlu0 %119
    %s122 = sor.u32 256, 8
    %123 = vbcast.lane.b32.xlu0 %v117, %s122
    %v124 = vpop.permute.xlu0 %123
    %v125 = vld [vmem:[#allocation7] sm:$0x1]
    %v127 = vlaneseq
    %v128 = vshrl.u32 %v127, 7
    %v129 = vsub.s32 0, %v128
    %v130 = vrot.slane %v125, %v129
    %v132 = vmul.f32 %v109, %v130
    %v133 = vmul.f32 %v113, %v130
    %v134 = vmul.f32 %v120, %v130
    %v135 = vmul.f32 %v124, %v130
    %v136 = vld [vmem:[#allocation8] sm:$0x1]
    %v138 = vlaneseq
    %v139 = vshrl.u32 %v138, 7
    %v140 = vsub.s32 0, %v139
    %v141 = vrot.slane %v136, %v140
    %v143 = vadd.f32 %v132, %v141
    %v144 = vadd.f32 %v133, %v141
    %v145 = vadd.f32 %v134, %v141
    %v146 = vadd.f32 %v135, %v141
    %v147 = vmul.f32 %v143, %v143
    %v148 = vmul.f32 %v144, %v144
    %v149 = vmul.f32 %v145, %v145
    %v150 = vmul.f32 %v146, %v146
    %v151 = vtanh.pop %v147
    %v152 = vtanh.pop %v148
    %v153 = vtanh.pop %v149
    %v154 = vtanh.pop %v150
    %v155 = vsub.f32 1.0, %v151
    %v156 = vsub.f32 1.0, %v152
    %v157 = vsub.f32 1.0, %v153
    %v158 = vsub.f32 1.0, %v154
    %v159 = vpack.c.bf16 %v156, %v155
    %v160 = vpack.c.bf16 %v158, %v157
    %v161 = vld [vmem:[#allocation10] sm:$0xf]
    %v162 = vld [vmem:[#allocation10 + $0x4] sm:$0xf]
    %v163 = vld [vmem:[#allocation10 + $0x8] sm:$0xf]
    %v164 = vld [vmem:[#allocation10 + $0xc] sm:$0xf]
    %v165 = vld [vmem:[#allocation10 + $0x10] sm:$0xf]
    %v166 = vld [vmem:[#allocation10 + $0x14] sm:$0xf]
    %v167 = vld [vmem:[#allocation10 + $0x18] sm:$0xf]
    %v168 = vld [vmem:[#allocation10 + $0x1c] sm:$0xf]
    %v169 = vld [vmem:[#allocation11] sm:$0x1]
    %v171 = vlaneseq
    %v172 = vshrl.u32 %v171, 7
    %v173 = vsub.s32 0, %v172
    %v174 = vrot.slane %v169, %v173
    %v184 = vunpack.c.l.b16 %v161
    %v185 = vunpack.c.l.b16 %v162
    %v186 = vunpack.c.l.b16 %v163
    %v187 = vunpack.c.l.b16 %v164
    %v188 = vunpack.c.l.b16 %v165
    %v189 = vunpack.c.l.b16 %v166
    %v190 = vunpack.c.l.b16 %v167
    %v191 = vunpack.c.l.b16 %v168
    %v192 = vpack.c.b16 %v185, %v184
    %v193 = vpack.c.b16 %v187, %v186
    %v194 = vpack.c.b16 %v189, %v188
    %v195 = vpack.c.b16 %v191, %v190
    %vm200 = vcmask 523264
    %v202 = vsel %vm200, %v159, 0
    %v205 = vsel %vm200, %v160, 0
    %207 = vmatprep.subr.bf16.mxu0 0
    %208 = vmatpush1.bf16.msra.mxu0 %v192
    %209 = vmatprep.subr.bf16.mxu0 0
    %210 = vmatpush1.bf16.msra.mxu0 %v193
    %211 = vmatprep.subr.bf16.mxu0 0
    %212 = vmatpush1.bf16.msra.mxu0 %v194
    %213 = vmatprep.subr.bf16.mxu0 0
    %214 = vmatpush1.bf16.msra.mxu0 %v195
    %215 = vmatprep.subr.bf16.mxu0 0
    %216 = vmatpush1.bf16.msra.mxu0 0
    %217 = vmatprep.subr.bf16.mxu0 0
    %218 = vmatpush1.bf16.msra.mxu0 0
    %219 = vmatprep.subr.bf16.mxu0 0
    %220 = vmatpush1.bf16.msra.mxu0 0
    %221 = vmatprep.subr.bf16.mxu0 0
    %222 = vmatpush1.bf16.msra.mxu0 0
    %223 = vmatprep.subr.bf16.mxu0 0
    %224 = vmatpush1.bf16.msra.mxu0 0
    %225 = vmatprep.subr.bf16.mxu0 0
    %226 = vmatpush1.bf16.msra.mxu0 0
    %227 = vmatprep.subr.bf16.mxu0 0
    %228 = vmatpush1.bf16.msra.mxu0 0
    %229 = vmatprep.subr.bf16.mxu0 0
    %230 = vmatpush1.bf16.msra.mxu0 0
    %231 = vmatprep.subr.bf16.mxu0 0
    %232 = vmatpush1.bf16.msra.mxu0 0
    %233 = vmatprep.subr.bf16.mxu0 0
    %234 = vmatpush1.bf16.msra.mxu0 0
    %235 = vmatprep.subr.bf16.mxu0 0
    %236 = vmatpush1.bf16.msra.mxu0 0
    %237 = vmatprep.subr.bf16.mxu0 0
    %238 = vmatpush1.bf16.msra.mxu0 0
    %239 = vmatprep.mubr.bf16.mxu0 0
    %240 = vmatmul.mubr.bf16.gmra.mrb[0].mxu0 %v202
    %v241 = vpop.f32.mrb[0].mxu0
    %v242 = vadd.f32 %v174, %v241
    %v243 = vpop.f32.mrb[0].mxu0
    %v244 = vpop.f32.mrb[0].mxu0
    %v245 = vadd.f32 %v174, %v244
    %v246 = vpop.f32.mrb[0].mxu0
    %247 = vmatprep.mubr.bf16.mxu0 0
    %248 = vmatmul.mubr.bf16.gmra.mrb[0].mxu0 %v205
    %v249 = vpop.f32.mrb[0].mxu0
    %v250 = vadd.f32 %v174, %v249
    %v251 = vpop.f32.mrb[0].mxu0
    %v252 = vpop.f32.mrb[0].mxu0
    %v253 = vadd.f32 %v174, %v252
    %v254 = vpop.f32.mrb[0].mxu0
    %255 = vdwg.mxu0
    %v256 = vmax.f32 %v242, 0.0
    %v257 = vmax.f32 %v245, 0.0
    %v258 = vmax.f32 %v250, 0.0
    %v259 = vmax.f32 %v253, 0.0
    %v260 = vld [vmem:[#allocation5] sm:$0x1]
    %v261 = vld [vmem:[#allocation5 + $0x1] sm:$0x1]
    %v262 = vlaneseq
    %v263 = vshrl.u32 %v262, 7
    %v264 = vsub.s32 0, %v263
    %v265 = vrot.slane %v260, %v264
    %267 = vbcast.lane.b32.xlu0 %v265, 256
    %v268 = vpop.permute.xlu0 %267
    %s270 = sor.u32 256, 8
    %271 = vbcast.lane.b32.xlu0 %v265, %s270
    %v272 = vpop.permute.xlu0 %271
    %v273 = vlaneseq
    %v274 = vshrl.u32 %v273, 7
    %v275 = vsub.s32 0, %v274
    %v276 = vrot.slane %v261, %v275
    %278 = vbcast.lane.b32.xlu0 %v276, 256
    %v279 = vpop.permute.xlu0 %278
    %s281 = sor.u32 256, 8
    %282 = vbcast.lane.b32.xlu0 %v276, %s281
    %v283 = vpop.permute.xlu0 %282
    %vm284 = vcmp.gt.f32.partialorder %v268, 0.0
    %vm285 = vcmp.gt.f32.partialorder %v272, 0.0
    %vm286 = vcmp.gt.f32.partialorder %v279, 0.0
    %vm287 = vcmp.gt.f32.partialorder %v283, 0.0
    %v288 = vsel %vm284, 1, 0
    %v289 = vsel %vm285, 1, 0
    %v290 = vsel %vm286, 1, 0
    %v291 = vsel %vm287, 1, 0
    %vm292 = vcmp.eq.s32.totalorder %v288, 1
    %vm293 = vcmp.eq.s32.totalorder %v289, 1
    %vm294 = vcmp.eq.s32.totalorder %v290, 1
    %vm295 = vcmp.eq.s32.totalorder %v291, 1
    %v296 = vsel %vm292, -inf, %v256
    %v297 = vsel %vm293, -inf, %v257
    %v298 = vsel %vm294, -inf, %v258
    %v299 = vsel %vm295, -inf, %v259
    %v300 = vmax.f32 %v296, %v297
    %v301 = vrot.slane %v300, 4
    %v302 = vmax.f32 %v300, %v301
    %v303 = vrot.slane %v302, 2
    %v304 = vmax.f32 %v302, %v303
    %v305 = vrot.slane %v304, 1
    %v306 = vmax.f32 %v304, %v305
    %v307 = vmax.f32 %v298, %v299
    %v308 = vrot.slane %v307, 4
    %v309 = vmax.f32 %v307, %v308
    %v310 = vrot.slane %v309, 2
    %v311 = vmax.f32 %v309, %v310
    %v312 = vrot.slane %v311, 1
    %v313 = vmax.f32 %v311, %v312
    %v314 = vsub.f32 %v296, %v306
    %v315 = vsub.f32 %v297, %v306
    %v316 = vsub.f32 %v298, %v313
    %v317 = vsub.f32 %v299, %v313
    %v318 = vmul.f32 %v314, 1.442695
    %v319 = vpow.pop %v318
    %v320 = vmul.f32 %v315, 1.442695
    %v321 = vpow.pop %v320
    %v322 = vmul.f32 %v316, 1.442695
    %v323 = vpow.pop %v322
    %v324 = vmul.f32 %v317, 1.442695
    %v325 = vpow.pop %v324
    %v326 = vadd.f32 %v319, %v321
    %v327 = vrot.slane %v326, 4
    %v328 = vadd.f32 %v326, %v327
    %v329 = vrot.slane %v328, 2
    %v330 = vadd.f32 %v328, %v329
    %v331 = vrot.slane %v330, 1
    %v332 = vadd.f32 %v330, %v331
    %v333 = vadd.f32 %v323, %v325
    %v334 = vrot.slane %v333, 4
    %v335 = vadd.f32 %v333, %v334
    %v336 = vrot.slane %v335, 2
    %v337 = vadd.f32 %v335, %v336
    %v338 = vrot.slane %v337, 1
    %v339 = vadd.f32 %v337, %v338
    %v340 = vrcp.pop %v332
    %v341 = vrcp.pop %v339
    %v342 = vmul.f32 %v319, %v340
    %v343 = vmul.f32 %v321, %v340
    %v344 = vmul.f32 %v323, %v341
    %v345 = vmul.f32 %v325, %v341
    %vm346 = vcmask 261120
    %347 = vst.msk [vmem:[#allocation13] sm:$0xff] %vm346, %v342
    %348 = vst.msk [vmem:[#allocation13 + $0x8] sm:$0xff] %vm346, %v343
    %349 = vst.msk [vmem:[#allocation13 + $0x10] sm:$0xff] %vm346, %v344
    %350 = vst.msk [vmem:[#allocation13 + $0x18] sm:$0xff] %vm346, %v345
    // Predicated region
    $region50: #{time_encoder.1} parent=1 // pred_check
      _
    $region51: #{time_encoder.1} parent=1 // pred_check_branch
      %352 = sbr.rel (0) target = $region53
    $region52: #{time_encoder.1} parent=1 // pred_region
      %s354 = ssub.s32 512, 512
      %355 = vsyncadd [#allocation4], %s354
      %s356 = sshll.u32 [#allocation13], 4
      %s357 = int_to_ptr.vmem [resolvable:$true] %s356
      %362 = dma.vmem_to_hbm [thread:$0]  %s357, 512, %s6, [#allocation4], 128, 128, 8
    $region53: #{time_encoder.1} parent=1 // pred_fallthru
      _
    // Predicated region
    $region54: #{time_encoder.1} parent=1 // pred_check
      _
    $region55: #{time_encoder.1} parent=1 // pred_check_branch
      %364 = sbr.rel (0) target = $region57
    $region56: #{time_encoder.1} parent=1 // pred_region
      %365 = dma.done [#allocation4], 512
    $region57: #{time_encoder.1} parent=1 // pred_fallthru
      _
    %366 = vsyncpa [#allocation3], 1
    %367 = vsyncpa [#allocation6], 1
    %368 = vsyncpa [#allocation9], 1
    %369 = vsyncpa [#allocation12], 1
    %370 = vsyncpa [#allocation4], 1

</llo_original>
